<compile_context>
chip_gen: v7x
topology: tpu7x:2x2x1
jax: 0.10.0
libtpu: 0.0.40
codegen_flags: <defaults>
</compile_context>

<pallas_src>
import numpy as np

import jax
import jax.numpy as jnp
from jax import lax
from jax.experimental import pallas as pl
from jax.experimental.pallas import tpu as pltpu


TILE_N = 128                 # node tile (rows of A / output, and K tile of A@H)
TILE_D = 128                 # embedding tile (lane-dense: multiple of 128)
VMEM_LIMIT = 32 * 1024 * 1024  # explicit scoped-VMEM budget (safe on v5e/v6e/v7x)


def _pad_to_multiple(x, mults):
    """Zero-pad each dim of x up to a multiple of mults[d]."""
    pads = [(0, (-s) % m) for s, m in zip(x.shape, mults)]
    if any(p[1] for p in pads):
        x = jnp.pad(x, pads)
    return x


# --------------------------------------------------------------------------
# Kernel 1: tiled dense matmul  H = X @ W   (f32 in, f32 accumulate)
# --------------------------------------------------------------------------
def _matmul_kernel(x_ref, w_ref, o_ref, acc_ref):
    @pl.when(pl.program_id(2) == 0)
    def _():
        acc_ref[...] = jnp.zeros_like(acc_ref)

    acc_ref[...] += jnp.dot(
        x_ref[...], w_ref[...], preferred_element_type=jnp.float32
    )

    @pl.when(pl.program_id(2) == pl.num_programs(2) - 1)
    def _():
        o_ref[...] = acc_ref[...].astype(o_ref.dtype)


def pallas_matmul(x, w, *, tm=TILE_N, tn=TILE_D, tk=TILE_D):
    m, kd = x.shape
    kd2, n = w.shape
    assert kd == kd2 and m % tm == 0 and n % tn == 0 and kd % tk == 0
    return pl.pallas_call(
        _matmul_kernel,
        out_shape=jax.ShapeDtypeStruct((m, n), jnp.float32),
        grid=(m // tm, n // tn, kd // tk),
        in_specs=[
            pl.BlockSpec((tm, tk), lambda i, j, k: (i, k)),
            pl.BlockSpec((tk, tn), lambda i, j, k: (k, j)),
        ],
        out_specs=pl.BlockSpec((tm, tn), lambda i, j, k: (i, j)),
        scratch_shapes=[pltpu.VMEM((tm, tn), jnp.float32)],
        compiler_params=pltpu.CompilerParams(
            dimension_semantics=("parallel", "parallel", "arbitrary"),
            vmem_limit_bytes=VMEM_LIMIT,
        ),
    )(x, w)


# --------------------------------------------------------------------------
# Kernel 2: block-sparse GCN propagation  out = relu(A_norm @ H)
#   A (bf16) and H (bf16) are streamed in 128x128 tiles; only adjacency column
#   blocks that are nonzero for a given row block are visited (scalar-prefetched
#   kblk/nblk tables drive the data-dependent index_map).  Accumulate in f32.
# --------------------------------------------------------------------------
def _prop_kernel(kblk_ref, nblk_ref, a_ref, h_ref, o_ref, acc_ref):
    i = pl.program_id(0)
    k = pl.program_id(2)

    @pl.when(k == 0)
    def _():
        acc_ref[...] = jnp.zeros_like(acc_ref)

    # Skip compute for padded entries of the per-row-block nonzero list.
    @pl.when(k < nblk_ref[i])
    def _():
        acc_ref[...] += jnp.dot(
            a_ref[...], h_ref[...], preferred_element_type=jnp.float32
        )

    @pl.when(k == pl.num_programs(2) - 1)
    def _():
        # torch.relu applied in propagate_embeddings, done in f32.
        o_ref[...] = jnp.maximum(acc_ref[...], 0.0).astype(o_ref.dtype)


def gcn_propagate(a_bf16, h_bf16, kblk_flat, nblk, *, max_k,
                  tile_n=TILE_N, tile_d=TILE_D):
    n_p = a_bf16.shape[0]
    d_p = h_bf16.shape[1]
    assert n_p % tile_n == 0 and d_p % tile_d == 0
    n_rb = n_p // tile_n
    grid = (n_rb, d_p // tile_d, max_k)

    def a_map(i, j, k, kblk, nblk_):
        return (i, kblk[i * max_k + k])

    def h_map(i, j, k, kblk, nblk_):
        return (kblk[i * max_k + k], j)

    def o_map(i, j, k, kblk, nblk_):
        return (i, j)

    return pl.pallas_call(
        _prop_kernel,
        out_shape=jax.ShapeDtypeStruct((n_p, d_p), jnp.float32),
        grid_spec=pltpu.PrefetchScalarGridSpec(
            num_scalar_prefetch=2,
            grid=grid,
            in_specs=[
                pl.BlockSpec((tile_n, tile_n), a_map),
                pl.BlockSpec((tile_n, tile_d), h_map),
            ],
            out_specs=pl.BlockSpec((tile_n, tile_d), o_map),
            scratch_shapes=[pltpu.VMEM((tile_n, tile_d), jnp.float32)],
        ),
        compiler_params=pltpu.CompilerParams(
            dimension_semantics=("parallel", "parallel", "arbitrary"),
            vmem_limit_bytes=VMEM_LIMIT,
        ),
    )(kblk_flat, nblk, a_bf16, h_bf16)


# --------------------------------------------------------------------------
# Kernel 3: predict()  scores = gu @ gi.T  — contract on last dims (no .T),
#           tiled over the [nu, ni] score matrix, both axes parallel.
# --------------------------------------------------------------------------
def _predict_kernel(gu_ref, gi_ref, o_ref):
    o_ref[...] = lax.dot_general(
        gu_ref[...], gi_ref[...],
        dimension_numbers=(((1,), (1,)), ((), ())),
        preferred_element_type=jnp.float32,
    ).astype(o_ref.dtype)


def gcn_predict(gu, gi, *, tm=TILE_N, tn=TILE_N):
    nu, d = gu.shape
    ni = gi.shape[0]
    gu_p = _pad_to_multiple(gu, (tm, TILE_D))
    gi_p = _pad_to_multiple(gi, (tn, TILE_D))
    nup, dp = gu_p.shape
    nip = gi_p.shape[0]
    out = pl.pallas_call(
        _predict_kernel,
        out_shape=jax.ShapeDtypeStruct((nup, nip), jnp.float32),
        grid=(nup // tm, nip // tn),
        in_specs=[
            pl.BlockSpec((tm, dp), lambda i, j: (i, 0)),
            pl.BlockSpec((tn, dp), lambda i, j: (j, 0)),
        ],
        out_specs=pl.BlockSpec((tm, tn), lambda i, j: (i, j)),
        compiler_params=pltpu.CompilerParams(
            dimension_semantics=("parallel", "parallel"),
            vmem_limit_bytes=VMEM_LIMIT,
        ),
    )(gu_p, gi_p)
    return out[:nu, :ni]


# --------------------------------------------------------------------------
# forward():  xui = sum(gamma_u * gamma_i, 1)
# Per the perf review this tiny batched row-dot is left to XLA (a Pallas call's
# fixed overhead dominates at batch~16, and a (b,1) output is fully lane-masked).
# --------------------------------------------------------------------------
def gcn_forward(gamma_u, gamma_i):
    xui = jnp.sum(gamma_u * gamma_i, axis=1)
    return xui, gamma_u, gamma_i


# --------------------------------------------------------------------------
# Glue: parameter init, adjacency, block-sparsity metadata, layer loop
# --------------------------------------------------------------------------
def xavier_normal(key, shape):
    fan_in, fan_out = shape
    std = (2.0 / (fan_in + fan_out)) ** 0.5
    return std * jax.random.normal(key, shape, dtype=jnp.float32)


def build_normalized_adj(key, num_users, num_items):
    # random bipartite user-item interactions -> symmetric normalized adjacency
    # TODO(synk): original adj is a torch_geometric sparse edge_index; the dense
    #             normalized matrix below is mathematically identical for GCNConv.
    r = (jax.random.uniform(key, (num_users, num_items)) < 0.4).astype(jnp.float32)
    n = num_users + num_items
    a = jnp.zeros((n, n), dtype=jnp.float32)
    a = a.at[:num_users, num_users:].set(r)
    a = a.at[num_users:, :num_users].set(r.T)
    deg = jnp.sum(a, axis=1)
    d_inv_sqrt = jnp.where(deg > 0, 1.0 / jnp.sqrt(jnp.maximum(deg, 1e-12)), 0.0)
    return a * d_inv_sqrt[:, None] * d_inv_sqrt[None, :]


def block_sparsity_meta(a_pad, tile):
    """Per 128-row block: which column blocks of A are nonzero (host-side, numpy)."""
    a_np = np.asarray(a_pad)
    nb = a_np.shape[0] // tile
    nz = np.abs(a_np).reshape(nb, tile, nb, tile).sum(axis=(1, 3)) > 0   # (nb, nb)
    nnz = nz.sum(axis=1).astype(np.int32)
    max_k = max(int(nnz.max()), 1)
    kblk = np.zeros((nb, max_k), dtype=np.int32)
    for i in range(nb):
        idx = np.nonzero(nz[i])[0]
        kblk[i, : len(idx)] = idx.astype(np.int32)
    return jnp.asarray(kblk.reshape(-1)), jnp.asarray(nnz), max_k


def propagate_embeddings(gu0, gi0, a_norm, weights):
    num_users, num_items = gu0.shape[0], gi0.shape[0]
    ego = jnp.concatenate([gu0, gi0], axis=0)                  # (N, D) f32

    # Pad nodes and embedding dims to lane/tile-dense multiples.
    a_pad = _pad_to_multiple(a_norm, (TILE_N, TILE_N))
    ego = _pad_to_multiple(ego, (TILE_N, TILE_D))
    kblk, nblk, max_k = block_sparsity_meta(a_pad, TILE_N)
    a_bf16 = a_pad.astype(jnp.bfloat16)                        # halve the dominant HBM stream

    for w in weights:
        w_pad = _pad_to_multiple(w, (TILE_D, TILE_D))
        h = pallas_matmul(ego, w_pad)                          # X @ W hoisted, f32
        ego = gcn_propagate(a_bf16, h.astype(jnp.bfloat16),    # relu(A @ H), f32 acc
                            kblk, nblk, max_k=max_k)
    d_out = weights[-1].shape[1]
    gu = ego[:num_users, :d_out]
    gi = ego[num_users:num_users + num_items, :d_out]
    return gu, gi


if __name__ == "__main__":
    # small deterministic config (N = 384 nodes -> 3x3 blocks of 128)
    num_users, num_items = 128, 256
    embed_k, weight_size, n_layers = 64, 64, 2
    batch_size = 16

    key = jax.random.PRNGKey(0)
    k_gu, k_gi, k_adj, k_w1, k_w2 = jax.random.split(key, 5)

    Gu = xavier_normal(k_gu, (num_users, embed_k))
    Gi = xavier_normal(k_gi, (num_items, embed_k))
    weight_size_list = [embed_k] + [weight_size] * n_layers
    wkeys = [k_w1, k_w2]
    Ws = [
        xavier_normal(wkeys[l], (weight_size_list[l], weight_size_list[l + 1]))
        for l in range(n_layers)
    ]
    A_norm = build_normalized_adj(k_adj, num_users, num_items)

    # propagate_embeddings (Pallas GCN layers)
    gu, gi = propagate_embeddings(Gu, Gi, A_norm, Ws)

    # forward() on a batch of (user, pos-item) pairs
    user_idx = jnp.arange(batch_size) % num_users
    pos_idx = (jnp.arange(batch_size) * 7) % num_items
    xui, gamma_u, gamma_i = gcn_forward(gu[user_idx], gi[pos_idx])

    # predict() full score matrix
    preds = gcn_predict(gu, gi)

    jax.block_until_ready((gu, gi, xui, gamma_u, gamma_i, preds))

    # ---- correctness checks ----
    def rel_err(out, ref):
        return float(jnp.max(jnp.abs(out - ref)) / (jnp.max(jnp.abs(ref)) + 1e-8))

    # full f32 reference for the propagation (kernel streams A/H as bf16)
    ego_ref = jnp.concatenate([Gu, Gi], axis=0)
    for w in Ws:
        h_ref = jnp.dot(ego_ref, w, precision=lax.Precision.HIGHEST)
        ego_ref = jnp.maximum(
            jnp.dot(A_norm, h_ref, precision=lax.Precision.HIGHEST), 0.0
        )
    gu_ref, gi_ref = ego_ref[:num_users], ego_ref[num_users:]
    assert rel_err(gu, gu_ref) < 5e-2, "gu mismatch"
    assert rel_err(gi, gi_ref) < 5e-2, "gi mismatch"

    # predict / forward checked against the (exact f32) kernel embeddings
    preds_ref = jnp.dot(gu, gi.T, precision=lax.Precision.HIGHEST)
    assert rel_err(preds, preds_ref) < 1e-2, "preds mismatch"
    xui_ref = jnp.sum(gu[user_idx] * gi[pos_idx], axis=1)
    assert jnp.allclose(xui, xui_ref, atol=1e-6), "xui mismatch"

    print("KERNEL_OK")
</pallas_src>

<mosaic_0001>
module attributes {stable_mosaic.version = 11 : i64} {
  func.func @_matmul_kernel(%arg0: i32, %arg1: i32, %arg2: i32, %arg3: memref<128x128xf32, #tpu.memory_space<vmem>>, %arg4: memref<128x128xf32, #tpu.memory_space<vmem>>, %arg5: memref<128x128xf32, #tpu.memory_space<vmem>>, %arg6: memref<128x128xf32, #tpu.memory_space<vmem>>) attributes {dimension_semantics = [#tpu.dimension_semantics<parallel>, #tpu.dimension_semantics<parallel>, #tpu.dimension_semantics<arbitrary>], iteration_bounds = array<i64: 3, 1, 1>, scalar_prefetch = 0 : i64, scratch_operands = 1 : i64, tpu.core_type = #tpu.core_type<tc>, window_params = [{transform_indices = @transform_0, window_bounds = array<i64: 128, 128>}, {transform_indices = @transform_1, window_bounds = array<i64: 128, 128>}, {transform_indices = @transform_2, window_bounds = array<i64: 128, 128>}]} {
    %c0_i32 = arith.constant 0 : i32
    %0 = arith.cmpi eq, %arg2, %c0_i32 : i32
    %1 = arith.extui %0 : i1 to i32
    %c0_i32_0 = arith.constant 0 : i32
    %2 = arith.cmpi ne, %1, %c0_i32_0 : i32
    scf.if %2 {
      %cst_10 = arith.constant 0.000000e+00 : f32
      %12 = vector.broadcast %cst_10 : f32 to vector<128x128xf32>
      %c0_11 = arith.constant 0 : index
      %c0_12 = arith.constant 0 : index
      %13 = vector.load %arg6[%c0_11, %c0_12] : memref<128x128xf32, #tpu.memory_space<vmem>>, vector<128x128xf32>
      tpu.vector_store %arg6[%c0_11, %c0_12], %12 {strides = array<i32>} : memref<128x128xf32, #tpu.memory_space<vmem>>, vector<128x128xf32>,
    } else {
    }
    %c0 = arith.constant 0 : index
    %c0_1 = arith.constant 0 : index
    %3 = vector.load %arg6[%c0, %c0_1] : memref<128x128xf32, #tpu.memory_space<vmem>>, vector<128x128xf32>
    %c0_2 = arith.constant 0 : index
    %c0_3 = arith.constant 0 : index
    %4 = vector.load %arg3[%c0_2, %c0_3] : memref<128x128xf32, #tpu.memory_space<vmem>>, vector<128x128xf32>
    %c0_4 = arith.constant 0 : index
    %c0_5 = arith.constant 0 : index
    %5 = vector.load %arg4[%c0_4, %c0_5] : memref<128x128xf32, #tpu.memory_space<vmem>>, vector<128x128xf32>
    %cst = arith.constant dense<0.000000e+00> : vector<128x128xf32>
    %6 = tpu.matmul %4, %5, %cst {dimension_numbers = #tpu.dot_dimension_numbers<[1], [0], [0], [1], [0, 0, 1, 1], [], []>} : vector<128x128xf32>, vector<128x128xf32>, vector<128x128xf32> -> vector<128x128xf32>
    %7 = arith.addf %3, %6 : vector<128x128xf32>
    %c0_6 = arith.constant 0 : index
    %c0_7 = arith.constant 0 : index
    %8 = vector.load %arg6[%c0_6, %c0_7] : memref<128x128xf32, #tpu.memory_space<vmem>>, vector<128x128xf32>
    tpu.vector_store %arg6[%c0_6, %c0_7], %7 {strides = array<i32>} : memref<128x128xf32, #tpu.memory_space<vmem>>, vector<128x128xf32>,
    %c0_i32_8 = arith.constant 0 : i32
    %9 = arith.cmpi eq, %arg2, %c0_i32_8 : i32
    %10 = arith.extui %9 : i1 to i32
    %c0_i32_9 = arith.constant 0 : i32
    %11 = arith.cmpi ne, %10, %c0_i32_9 : i32
    scf.if %11 {
      %c0_10 = arith.constant 0 : index
      %c0_11 = arith.constant 0 : index
      %12 = vector.load %arg6[%c0_10, %c0_11] : memref<128x128xf32, #tpu.memory_space<vmem>>, vector<128x128xf32>
      %c0_12 = arith.constant 0 : index
      %c0_13 = arith.constant 0 : index
      %13 = vector.load %arg5[%c0_12, %c0_13] : memref<128x128xf32, #tpu.memory_space<vmem>>, vector<128x128xf32>
      tpu.vector_store %arg5[%c0_12, %c0_13], %12 {strides = array<i32>} : memref<128x128xf32, #tpu.memory_space<vmem>>, vector<128x128xf32>,
    } else {
    }
    return
  }
  func.func @transform_0(%arg0: i32, %arg1: i32, %arg2: i32) -> (i32, i32) {
    %c0_i32 = arith.constant 0 : i32
    return %arg0, %arg2 : i32, i32
  }
  func.func @transform_1(%arg0: i32, %arg1: i32, %arg2: i32) -> (i32, i32) {
    %c0_i32 = arith.constant 0 : i32
    return %arg2, %arg1 : i32, i32
  }
  func.func @transform_2(%arg0: i32, %arg1: i32, %arg2: i32) -> (i32, i32) {
    %c0_i32 = arith.constant 0 : i32
    return %arg0, %arg1 : i32, i32
  }
}

</mosaic_0001>

<llo_original>
// kernel: tpu_custom_call.1
$region0: #{tpu_custom_call.1}
  #allocation0 [shape = 'u32[]', space=smem, size = 0x4, offset = 0x4, fixed_abs, tag = 'smem constant byte address 0x4 - core index']
  #allocation1 [shape = 'u32[144,128]{1,0:T(1,128)}', space=vmem, size = 0x12000, scoped, tag = 'internal scratch']
  #allocation2 [shape = 'f32[128,128]{1,0:T(8,128)}', space=vmem, size = 0x10000, scoped, tag = 'scratch operand']
  %s0 = inlined_call_operand.hbm [shape: f32[384,128], index: 0, kind: input, shape index: {}]
  %s1 = inlined_call_operand.hbm [shape: f32[128,128], index: 1, kind: input, shape index: {}]
  %s2 = inlined_call_operand.hbm [shape: f32[384,128], index: 2, kind: output, shape index: {}]
  %s3 = sld [smem:[#allocation0]]
  $region57: #{tpu_custom_call.1} parent=0
    _
  %s5 = ssub.s32 1, %s3
  %s6 = scalar_select 0, %s5, %s3
  $region1: #{tpu_custom_call.1} parent=0
    #allocation3 [shape = 'u8[131072]{0}', space=vmem, size = 0x20000, scoped, tag = 'input window, operand 0']
    #allocation4 [shape = 's32[2]{0}', space=sflag, size = 0x8, scoped, tag = 'scoped memory for tpu_custom_call.1']
    #allocation5 [shape = 's32[2]{0}', space=sflag, size = 0x8, scoped, tag = 'scoped memory for tpu_custom_call.1']
    #allocation6 [shape = 'u8[65536]{0}', space=vmem, size = 0x10000, scoped, tag = 'input window, operand 1, single buffered']
    #allocation7 [shape = 's32[1]{0}', space=sflag, size = 0x4, scoped, tag = 'scoped memory for tpu_custom_call.1']
    #allocation8 [shape = 'u8[131072]{0}', space=vmem, size = 0x20000, scoped, tag = 'output window, operand 0']
    %7 = vsyncpa [#allocation4], 0
    %s8 = scalar_lea.sflag [#allocation4], 1
    %9 = vsyncpa %s8, 0
    %10 = vsyncpa [#allocation7], 0
    %11 = vsyncpa [#allocation5], 0
    %s12 = scalar_lea.sflag [#allocation5], 1
    %13 = vsyncpa %s12, 0
    loop: start=0, step=1, limit=5
    $region2: #{tpu_custom_call.1} parent=1 // loop_pre_header
      _
    $region3: #{tpu_custom_call.1} parent=1 // loop_header
      %s15 = sphi 0, %s19
      %p16 = scmp.ge.s32.totalorder %s15, 5
      %s22 = sphi 0, %s41
      %s23 = sphi 0, %s37
      %s24 = sphi 0, %s33
      %s25 = sphi 0, %s22
      %s26 = sphi 0, %s23
      %s27 = sphi 0, %s24
      %s28 = sphi 0, %s25
      %s29 = sphi 0, %s26
      %s30 = sphi 0, %s27
      %s46 = sphi 0, %s48
      %s49 = sphi 0, %s46
      %s50 = sphi 0, %s49
      %s66 = sphi 0, %s50
      %s74 = sphi 0, %s76
      %s77 = sphi 0, %s74
      %s78 = sphi 0, %s77
      %s94 = sphi 0, %s78
      %s102 = sphi 0, %s104
      %s105 = sphi 0, %s102
      %s106 = sphi 0, %s105
      %s122 = sphi 0, %s106
    $region4: #{tpu_custom_call.1} parent=1 // loop_header_branch
      %18 = sbr.rel (%p16) target = $region8
    $region5: #{tpu_custom_call.1} parent=1 // loop_body
      %s20 = ssub.s32 %s15, 1
      %s21 = ssub.s32 %s15, 2
      %s31 = sadd.s32 1, %s24
      %p32 = scmp.ge.s32.totalorder %s31, 1
      %s33 = scalar_select %p32, 0, %s31
      %s34 = sadd.s32 1, %s23
      %s35 = scalar_select %p32, %s34, %s23
      %p36 = scmp.ge.s32.totalorder %s35, 1
      %s37 = scalar_select %p36, 0, %s35
      %s38 = sadd.s32 1, %s22
      %s39 = scalar_select %p36, %s38, %s22
      %p40 = scmp.ge.s32.totalorder %s39, 3
      %s41 = scalar_select %p40, 0, %s39
      %s42 = ssub.s32 %s22, %s41
      %s43 = ssub.s32 %s24, %s33
      %s44 = sor.u32 %s42, %s43
      %p45 = scmp.eq.s32.totalorder %s44, 0
      %s47 = sadd.s32 %s46, 1
      %s48 = scalar_select %p45, %s46, %s47
      %p51 = pneg %p45
      %p52 = scmp.eq.s32.totalorder %s15, 2
      %p53 = por %p51, %p52
      %p54 = scmp.ne.s32.totalorder %s46, %s49
      %p55 = scmp.eq.s32.totalorder %s15, 0
      %p56 = por %p54, %p55
      %p57 = scmp.ne.s32.totalorder %s46, %s49
      %p58 = scmp.eq.s32.totalorder %s20, 2
      %p59 = por %p57, %p58
      %p60 = scmp.ne.s32.totalorder %s49, %s50
      %p61 = scmp.eq.s32.totalorder %s20, 0
      %p62 = por %p60, %p61
      %p63 = scmp.ne.s32.totalorder %s49, %s50
      %p64 = scmp.eq.s32.totalorder %s21, 2
      %p65 = por %p63, %p64
      %p67 = scmp.ne.s32.totalorder %s50, %s66
      %p68 = scmp.eq.s32.totalorder %s21, 0
      %p69 = por %p67, %p68
      %s70 = ssub.s32 %s24, %s33
      %s71 = ssub.s32 %s23, %s37
      %s72 = sor.u32 %s70, %s71
      %p73 = scmp.eq.s32.totalorder %s72, 0
      %s75 = sadd.s32 %s74, 1
      %s76 = scalar_select %p73, %s74, %s75
      %p79 = pneg %p73
      %p80 = scmp.eq.s32.totalorder %s15, 2
      %p81 = por %p79, %p80
      %p82 = scmp.ne.s32.totalorder %s74, %s77
      %p83 = scmp.eq.s32.totalorder %s15, 0
      %p84 = por %p82, %p83
      %p85 = scmp.ne.s32.totalorder %s74, %s77
      %p86 = scmp.eq.s32.totalorder %s20, 2
      %p87 = por %p85, %p86
      %p88 = scmp.ne.s32.totalorder %s77, %s78
      %p89 = scmp.eq.s32.totalorder %s20, 0
      %p90 = por %p88, %p89
      %p91 = scmp.ne.s32.totalorder %s77, %s78
      %p92 = scmp.eq.s32.totalorder %s21, 2
      %p93 = por %p91, %p92
      %p95 = scmp.ne.s32.totalorder %s78, %s94
      %p96 = scmp.eq.s32.totalorder %s21, 0
      %p97 = por %p95, %p96
      %s98 = ssub.s32 %s22, %s41
      %s99 = ssub.s32 %s23, %s37
      %s100 = sor.u32 %s98, %s99
      %p101 = scmp.eq.s32.totalorder %s100, 0
      %s103 = sadd.s32 %s102, 1
      %s104 = scalar_select %p101, %s102, %s103
      %p107 = pneg %p101
      %p108 = scmp.eq.s32.totalorder %s15, 2
      %p109 = por %p107, %p108
      %p110 = scmp.ne.s32.totalorder %s102, %s105
      %p111 = scmp.eq.s32.totalorder %s15, 0
      %p112 = por %p110, %p111
      %p113 = scmp.ne.s32.totalorder %s102, %s105
      %p114 = scmp.eq.s32.totalorder %s20, 2
      %p115 = por %p113, %p114
      %p116 = scmp.ne.s32.totalorder %s105, %s106
      %p117 = scmp.eq.s32.totalorder %s20, 0
      %p118 = por %p116, %p117
      %p119 = scmp.ne.s32.totalorder %s105, %s106
      %p120 = scmp.eq.s32.totalorder %s21, 2
      %p121 = por %p119, %p120
      %p123 = scmp.ne.s32.totalorder %s106, %s122
      %p124 = scmp.eq.s32.totalorder %s21, 0
      %p125 = por %p123, %p124
      %p126 = scmp.le.s32.totalorder 1, %s15
      %p127 = scmp.lt.s32.totalorder %s15, 4
      %p128 = pnand %p126, %p127
      %p129 = pneg %p128
      // Predicated region
      $region9: #{tpu_custom_call.1} parent=5 // pred_check
        _
      $region10: #{tpu_custom_call.1} parent=5 // pred_check_branch
        %131 = sbr.rel (%p128) target = $region12
      $region11: #{tpu_custom_call.1} parent=5 // pred_region
        %s132 = ssub.s32 %s15, 1
        // Predicated region
        $region13: #{tpu_custom_call.1} parent=11 // pred_check
          %p133 = pneg %p90
        $region14: #{tpu_custom_call.1} parent=11 // pred_check_branch
          %135 = sbr.rel (%p133) target = $region16
        $region15: #{tpu_custom_call.1} parent=11 // pred_region
          %s136 = smul.u32 16, %s27
          %s138 = ssub.s32 2048, 2048
          %139 = vsyncadd [#allocation7], %s138
          %s140 = sadd.s32 %s26, %s136
          %s141 = smul.addr %s140, 128
          %s142 = scalar_lea.hbm %s1, %s141
          %s143 = sshll.u32 [#allocation6], 4
          %s144 = int_to_ptr.vmem [resolvable:$true] %s143
          %149 = dma.hbm_to_vmem [thread:$0]  %s142, 2048, %s144, [#allocation7], 128, 128, 8
        $region16: #{tpu_custom_call.1} parent=11 // pred_fallthru
          _
      $region12: #{tpu_custom_call.1} parent=5 // pred_fallthru
        _
      %p150 = scmp.lt.s32.totalorder %s15, 3
      // Predicated region
      $region17: #{tpu_custom_call.1} parent=5 // pred_check
        %p151 = pneg %p150
      $region18: #{tpu_custom_call.1} parent=5 // pred_check_branch
        %153 = sbr.rel (%p151) target = $region20
      $region19: #{tpu_custom_call.1} parent=5 // pred_region
        // Predicated region
        $region21: #{tpu_custom_call.1} parent=19 // pred_check
          %p154 = pneg %p56
        $region22: #{tpu_custom_call.1} parent=19 // pred_check_branch
          %156 = sbr.rel (%p154) target = $region24
        $region23: #{tpu_custom_call.1} parent=19 // pred_region
          %s157 = sand.u32 %s46, 1
          %s158 = scalar_lea.sflag [#allocation4], %s157
          %s159 = sand.u32 %s46, 1
          %s160 = smul.addr %s159, 128
          %s161 = scalar_lea.vmem [#allocation3], %s160
          %s162 = smul.u32 16, %s22
          %s164 = ssub.s32 2048, 2048
          %165 = vsyncadd %s158, %s164
          %s166 = sadd.s32 %s24, %s162
          %s167 = smul.addr %s166, 128
          %s168 = scalar_lea.hbm %s0, %s167
          %s169 = sshll.u32 %s161, 4
          %s170 = int_to_ptr.vmem [resolvable:$true] %s169
          %175 = dma.hbm_to_vmem [thread:$0]  %s168, 2048, %s170, %s158, 128, 128, 8
        $region24: #{tpu_custom_call.1} parent=19 // pred_fallthru
          _
      $region20: #{tpu_custom_call.1} parent=5 // pred_fallthru
        _
      %p176 = scmp.le.s32.totalorder 1, %s15
      %p177 = scmp.lt.s32.totalorder %s15, 4
      %p178 = pnand %p176, %p177
      %p179 = pneg %p178
      // Predicated region
      $region25: #{tpu_custom_call.1} parent=5 // pred_check
        _
      $region26: #{tpu_custom_call.1} parent=5 // pred_check_branch
        %181 = sbr.rel (%p178) target = $region28
      $region27: #{tpu_custom_call.1} parent=5 // pred_region
        %s182 = ssub.s32 %s15, 1
        %s183 = sand.u32 %s49, 1
        %s184 = scalar_lea.sflag [#allocation4], %s183
        %s185 = sand.u32 %s49, 1
        %s186 = smul.addr %s185, 128
        %s187 = scalar_lea.vmem [#allocation3], %s186
        // Predicated region
        $region29: #{tpu_custom_call.1} parent=27 // pred_check
          %p188 = pneg %p62
        $region30: #{tpu_custom_call.1} parent=27 // pred_check_branch
          %190 = sbr.rel (%p188) target = $region32
        $region31: #{tpu_custom_call.1} parent=27 // pred_region
          %191 = dma.done %s184, 2048
        $region32: #{tpu_custom_call.1} parent=27 // pred_fallthru
          _
        // Predicated region
        $region33: #{tpu_custom_call.1} parent=27 // pred_check
          %p192 = pneg %p90
        $region34: #{tpu_custom_call.1} parent=27 // pred_check_branch
          %194 = sbr.rel (%p192) target = $region36
        $region35: #{tpu_custom_call.1} parent=27 // pred_region
          %195 = dma.done [#allocation7], 2048
        $region36: #{tpu_custom_call.1} parent=27 // pred_fallthru
          _
        %s196 = sand.u32 %s49, 1
        %s197 = scalar_lea.sflag [#allocation4], %s196
        %s198 = sand.u32 %s49, 1
        %s199 = smul.addr %s198, 128
        %s200 = scalar_lea.vmem [#allocation3], %s199
        %p201 = pneg %p62
        %p202 = pneg %p59
        %p203 = pneg %p90
        %p204 = pneg %p87
        %p205 = pneg %p118
        %p206 = pneg %p115
        %s207 = sand.u32 %s105, 1
        %s208 = scalar_lea.sflag [#allocation5], %s207
        %s209 = sand.u32 %s105, 1
        %s210 = smul.addr %s209, 128
        %s211 = scalar_lea.vmem [#allocation8], %s210
        %s212 = smul.u32 16, %s25
        %s213 = smul.u32 16, %s27
        %s214 = smul.u32 16, %s25
        %p215 = scmp.eq.s32.totalorder %s27, 0
        // Predicated region
        $region37: #{tpu_custom_call.1} parent=27 // pred_check
          %p216 = pneg %p215
        $region38: #{tpu_custom_call.1} parent=27 // pred_check_branch
          %218 = sbr.rel (%p216) target = $region40
        $region39: #{tpu_custom_call.1} parent=27 // pred_region
          %219 = vst [vmem:[#allocation2] sm:$0xff] 0.0
          %220 = vst [vmem:[#allocation2 + $0x8] sm:$0xff] 0.0
          %221 = vst [vmem:[#allocation2 + $0x10] sm:$0xff] 0.0
          %222 = vst [vmem:[#allocation2 + $0x18] sm:$0xff] 0.0
          %223 = vst [vmem:[#allocation2 + $0x20] sm:$0xff] 0.0
          %224 = vst [vmem:[#allocation2 + $0x28] sm:$0xff] 0.0
          %225 = vst [vmem:[#allocation2 + $0x30] sm:$0xff] 0.0
          %226 = vst [vmem:[#allocation2 + $0x38] sm:$0xff] 0.0
          %227 = vst [vmem:[#allocation2 + $0x40] sm:$0xff] 0.0
          %228 = vst [vmem:[#allocation2 + $0x48] sm:$0xff] 0.0
          %229 = vst [vmem:[#allocation2 + $0x50] sm:$0xff] 0.0
          %230 = vst [vmem:[#allocation2 + $0x58] sm:$0xff] 0.0
          %231 = vst [vmem:[#allocation2 + $0x60] sm:$0xff] 0.0
          %232 = vst [vmem:[#allocation2 + $0x68] sm:$0xff] 0.0
          %233 = vst [vmem:[#allocation2 + $0x70] sm:$0xff] 0.0
          %234 = vst [vmem:[#allocation2 + $0x78] sm:$0xff] 0.0
        $region40: #{tpu_custom_call.1} parent=27 // pred_fallthru
          _
        %v235 = vld [vmem:[#allocation2] sm:$0xff]
        %v236 = vld [vmem:[#allocation2 + $0x8] sm:$0xff]
        %v237 = vld [vmem:[#allocation2 + $0x10] sm:$0xff]
        %v238 = vld [vmem:[#allocation2 + $0x18] sm:$0xff]
        %v239 = vld [vmem:[#allocation2 + $0x20] sm:$0xff]
        %v240 = vld [vmem:[#allocation2 + $0x28] sm:$0xff]
        %v241 = vld [vmem:[#allocation2 + $0x30] sm:$0xff]
        %v242 = vld [vmem:[#allocation2 + $0x38] sm:$0xff]
        %v243 = vld [vmem:[#allocation2 + $0x40] sm:$0xff]
        %v244 = vld [vmem:[#allocation2 + $0x48] sm:$0xff]
        %v245 = vld [vmem:[#allocation2 + $0x50] sm:$0xff]
        %v246 = vld [vmem:[#allocation2 + $0x58] sm:$0xff]
        %v247 = vld [vmem:[#allocation2 + $0x60] sm:$0xff]
        %v248 = vld [vmem:[#allocation2 + $0x68] sm:$0xff]
        %v249 = vld [vmem:[#allocation2 + $0x70] sm:$0xff]
        %v250 = vld [vmem:[#allocation2 + $0x78] sm:$0xff]
        %v251 = vld [vmem:[%s187] sm:$0xff]
        %v252 = vld [vmem:[%s187 + $0x8] sm:$0xff]
        %v253 = vld [vmem:[%s187 + $0x10] sm:$0xff]
        %v254 = vld [vmem:[%s187 + $0x18] sm:$0xff]
        %v255 = vld [vmem:[%s187 + $0x20] sm:$0xff]
        %v256 = vld [vmem:[%s187 + $0x28] sm:$0xff]
        %v257 = vld [vmem:[%s187 + $0x30] sm:$0xff]
        %v258 = vld [vmem:[%s187 + $0x38] sm:$0xff]
        %v259 = vld [vmem:[%s187 + $0x40] sm:$0xff]
        %v260 = vld [vmem:[%s187 + $0x48] sm:$0xff]
        %v261 = vld [vmem:[%s187 + $0x50] sm:$0xff]
        %v262 = vld [vmem:[%s187 + $0x58] sm:$0xff]
        %v263 = vld [vmem:[%s187 + $0x60] sm:$0xff]
        %v264 = vld [vmem:[%s187 + $0x68] sm:$0xff]
        %v265 = vld [vmem:[%s187 + $0x70] sm:$0xff]
        %v266 = vld [vmem:[%s187 + $0x78] sm:$0xff]
        %v267 = vld [vmem:[#allocation6] sm:$0xff]
        %v268 = vld [vmem:[#allocation6 + $0x8] sm:$0xff]
        %v269 = vld [vmem:[#allocation6 + $0x10] sm:$0xff]
        %v270 = vld [vmem:[#allocation6 + $0x18] sm:$0xff]
        %v271 = vld [vmem:[#allocation6 + $0x20] sm:$0xff]
        %v272 = vld [vmem:[#allocation6 + $0x28] sm:$0xff]
        %v273 = vld [vmem:[#allocation6 + $0x30] sm:$0xff]
        %v274 = vld [vmem:[#allocation6 + $0x38] sm:$0xff]
        %v275 = vld [vmem:[#allocation6 + $0x40] sm:$0xff]
        %v276 = vld [vmem:[#allocation6 + $0x48] sm:$0xff]
        %v277 = vld [vmem:[#allocation6 + $0x50] sm:$0xff]
        %v278 = vld [vmem:[#allocation6 + $0x58] sm:$0xff]
        %v279 = vld [vmem:[#allocation6 + $0x60] sm:$0xff]
        %v280 = vld [vmem:[#allocation6 + $0x68] sm:$0xff]
        %v281 = vld [vmem:[#allocation6 + $0x70] sm:$0xff]
        %v282 = vld [vmem:[#allocation6 + $0x78] sm:$0xff]
        %283 = vmatprep.subr.mxu0 0.0
        %284 = vmatpush1.msra.mxu0 %v267
        %285 = vmatprep.subr.mxu0 0.0
        %286 = vmatpush1.msra.mxu0 %v268
        %287 = vmatprep.subr.mxu0 0.0
        %288 = vmatpush1.msra.mxu0 %v269
        %289 = vmatprep.subr.mxu0 0.0
        %290 = vmatpush1.msra.mxu0 %v270
        %291 = vmatprep.subr.mxu0 0.0
        %292 = vmatpush1.msra.mxu0 %v271
        %293 = vmatprep.subr.mxu0 0.0
        %294 = vmatpush1.msra.mxu0 %v272
        %295 = vmatprep.subr.mxu0 0.0
        %296 = vmatpush1.msra.mxu0 %v273
        %297 = vmatprep.subr.mxu0 0.0
        %298 = vmatpush1.msra.mxu0 %v274
        %299 = vmatprep.subr.mxu0 0.0
        %300 = vmatpush1.msra.mxu0 %v275
        %301 = vmatprep.subr.mxu0 0.0
        %302 = vmatpush1.msra.mxu0 %v276
        %303 = vmatprep.subr.mxu0 0.0
        %304 = vmatpush1.msra.mxu0 %v277
        %305 = vmatprep.subr.mxu0 0.0
        %306 = vmatpush1.msra.mxu0 %v278
        %307 = vmatprep.subr.mxu0 0.0
        %308 = vmatpush1.msra.mxu0 %v279
        %309 = vmatprep.subr.mxu0 0.0
        %310 = vmatpush1.msra.mxu0 %v280
        %311 = vmatprep.subr.mxu0 0.0
        %312 = vmatpush1.msra.mxu0 %v281
        %313 = vmatprep.subr.mxu0 0.0
        %314 = vmatpush1.msra.mxu0 %v282
        %315 = vmatprep.subr.mxu0 0.0
        %316 = vmatpush1.msra.mxu0 0.0
        %317 = vmatprep.subr.mxu0 0.0
        %318 = vmatpush1.msra.mxu0 0.0
        %319 = vmatprep.subr.mxu0 0.0
        %320 = vmatpush1.msra.mxu0 0.0
        %321 = vmatprep.subr.mxu0 0.0
        %322 = vmatpush1.msra.mxu0 0.0
        %323 = vmatprep.subr.mxu0 0.0
        %324 = vmatpush1.msra.mxu0 0.0
        %325 = vmatprep.subr.mxu0 0.0
        %326 = vmatpush1.msra.mxu0 0.0
        %327 = vmatprep.subr.mxu0 0.0
        %328 = vmatpush1.msra.mxu0 0.0
        %329 = vmatprep.subr.mxu0 0.0
        %330 = vmatpush1.msra.mxu0 0.0
        %331 = vmatprep.subr.mxu0 0.0
        %332 = vmatpush1.msra.mxu0 0.0
        %333 = vmatprep.subr.mxu0 0.0
        %334 = vmatpush1.msra.mxu0 0.0
        %335 = vmatprep.subr.mxu0 0.0
        %336 = vmatpush1.msra.mxu0 0.0
        %337 = vmatprep.subr.mxu0 0.0
        %338 = vmatpush1.msra.mxu0 0.0
        %339 = vmatprep.subr.mxu0 0.0
        %340 = vmatpush1.msra.mxu0 0.0
        %341 = vmatprep.subr.mxu0 0.0
        %342 = vmatpush1.msra.mxu0 0.0
        %343 = vmatprep.subr.mxu0 0.0
        %344 = vmatpush1.msra.mxu0 0.0
        %345 = vmatprep.subr.mxu0 0.0
        %346 = vmatpush1.msra.mxu0 0.0
        %347 = vmatprep.mubr.f32.mxu0 0.0
        %348 = vmatmul.mubr.f32.gmra.mrb[0].mxu0 %v251
        %v349 = vpop.f32.mrb[0].mxu0
        %v350 = vadd.f32 0.0, %v349
        %v351 = vpop.f32.mrb[0].mxu0
        %352 = vmatprep.mubr.f32.mxu0 0.0
        %353 = vmatmul.mubr.f32.gmra.mrb[0].mxu0 %v252
        %v354 = vpop.f32.mrb[0].mxu0
        %v355 = vadd.f32 0.0, %v354
        %v356 = vpop.f32.mrb[0].mxu0
        %357 = vmatprep.mubr.f32.mxu0 0.0
        %358 = vmatmul.mubr.f32.gmra.mrb[0].mxu0 %v253
        %v359 = vpop.f32.mrb[0].mxu0
        %v360 = vadd.f32 0.0, %v359
        %v361 = vpop.f32.mrb[0].mxu0
        %362 = vmatprep.mubr.f32.mxu0 0.0
        %363 = vmatmul.mubr.f32.gmra.mrb[0].mxu0 %v254
        %v364 = vpop.f32.mrb[0].mxu0
        %v365 = vadd.f32 0.0, %v364
        %v366 = vpop.f32.mrb[0].mxu0
        %367 = vmatprep.mubr.f32.mxu0 0.0
        %368 = vmatmul.mubr.f32.gmra.mrb[0].mxu0 %v255
        %v369 = vpop.f32.mrb[0].mxu0
        %v370 = vadd.f32 0.0, %v369
        %v371 = vpop.f32.mrb[0].mxu0
        %372 = vmatprep.mubr.f32.mxu0 0.0
        %373 = vmatmul.mubr.f32.gmra.mrb[0].mxu0 %v256
        %v374 = vpop.f32.mrb[0].mxu0
        %v375 = vadd.f32 0.0, %v374
        %v376 = vpop.f32.mrb[0].mxu0
        %377 = vmatprep.mubr.f32.mxu0 0.0
        %378 = vmatmul.mubr.f32.gmra.mrb[0].mxu0 %v257
        %v379 = vpop.f32.mrb[0].mxu0
        %v380 = vadd.f32 0.0, %v379
        %v381 = vpop.f32.mrb[0].mxu0
        %382 = vmatprep.mubr.f32.mxu0 0.0
        %383 = vmatmul.mubr.f32.gmra.mrb[0].mxu0 %v258
        %v384 = vpop.f32.mrb[0].mxu0
        %v385 = vadd.f32 0.0, %v384
        %v386 = vpop.f32.mrb[0].mxu0
        %387 = vmatprep.mubr.f32.mxu0 0.0
        %388 = vmatmul.mubr.f32.gmra.mrb[0].mxu0 %v259
        %v389 = vpop.f32.mrb[0].mxu0
        %v390 = vadd.f32 0.0, %v389
        %v391 = vpop.f32.mrb[0].mxu0
        %392 = vmatprep.mubr.f32.mxu0 0.0
        %393 = vmatmul.mubr.f32.gmra.mrb[0].mxu0 %v260
        %v394 = vpop.f32.mrb[0].mxu0
        %v395 = vadd.f32 0.0, %v394
        %v396 = vpop.f32.mrb[0].mxu0
        %397 = vmatprep.mubr.f32.mxu0 0.0
        %398 = vmatmul.mubr.f32.gmra.mrb[0].mxu0 %v261
        %v399 = vpop.f32.mrb[0].mxu0
        %v400 = vadd.f32 0.0, %v399
        %v401 = vpop.f32.mrb[0].mxu0
        %402 = vmatprep.mubr.f32.mxu0 0.0
        %403 = vmatmul.mubr.f32.gmra.mrb[0].mxu0 %v262
        %v404 = vpop.f32.mrb[0].mxu0
        %v405 = vadd.f32 0.0, %v404
        %v406 = vpop.f32.mrb[0].mxu0
        %407 = vmatprep.mubr.f32.mxu0 0.0
        %408 = vmatmul.mubr.f32.gmra.mrb[0].mxu0 %v263
        %v409 = vpop.f32.mrb[0].mxu0
        %v410 = vadd.f32 0.0, %v409
        %v411 = vpop.f32.mrb[0].mxu0
        %412 = vmatprep.mubr.f32.mxu0 0.0
        %413 = vmatmul.mubr.f32.gmra.mrb[0].mxu0 %v264
        %v414 = vpop.f32.mrb[0].mxu0
        %v415 = vadd.f32 0.0, %v414
        %v416 = vpop.f32.mrb[0].mxu0
        %417 = vmatprep.mubr.f32.mxu0 0.0
        %418 = vmatmul.mubr.f32.gmra.mrb[0].mxu0 %v265
        %v419 = vpop.f32.mrb[0].mxu0
        %v420 = vadd.f32 0.0, %v419
        %v421 = vpop.f32.mrb[0].mxu0
        %422 = vmatprep.mubr.f32.mxu0 0.0
        %423 = vmatmul.mubr.f32.gmra.mrb[0].mxu0 %v266
        %v424 = vpop.f32.mrb[0].mxu0
        %v425 = vadd.f32 0.0, %v424
        %v426 = vpop.f32.mrb[0].mxu0
        %427 = vdwg.mxu0
        %v428 = vadd.f32 %v235, %v350
        %v429 = vadd.f32 %v236, %v355
        %v430 = vadd.f32 %v237, %v360
        %v431 = vadd.f32 %v238, %v365
        %v432 = vadd.f32 %v239, %v370
        %v433 = vadd.f32 %v240, %v375
        %v434 = vadd.f32 %v241, %v380
        %v435 = vadd.f32 %v242, %v385
        %v436 = vadd.f32 %v243, %v390
        %v437 = vadd.f32 %v244, %v395
        %v438 = vadd.f32 %v245, %v400
        %v439 = vadd.f32 %v246, %v405
        %v440 = vadd.f32 %v247, %v410
        %v441 = vadd.f32 %v248, %v415
        %v442 = vadd.f32 %v249, %v420
        %v443 = vadd.f32 %v250, %v425
        %444 = vst [vmem:[#allocation2] sm:$0xff] %v428
        %445 = vst [vmem:[#allocation2 + $0x8] sm:$0xff] %v429
        %446 = vst [vmem:[#allocation2 + $0x10] sm:$0xff] %v430
        %447 = vst [vmem:[#allocation2 + $0x18] sm:$0xff] %v431
        %448 = vst [vmem:[#allocation2 + $0x20] sm:$0xff] %v432
        %449 = vst [vmem:[#allocation2 + $0x28] sm:$0xff] %v433
        %450 = vst [vmem:[#allocation2 + $0x30] sm:$0xff] %v434
        %451 = vst [vmem:[#allocation2 + $0x38] sm:$0xff] %v435
        %452 = vst [vmem:[#allocation2 + $0x40] sm:$0xff] %v436
        %453 = vst [vmem:[#allocation2 + $0x48] sm:$0xff] %v437
        %454 = vst [vmem:[#allocation2 + $0x50] sm:$0xff] %v438
        %455 = vst [vmem:[#allocation2 + $0x58] sm:$0xff] %v439
        %456 = vst [vmem:[#allocation2 + $0x60] sm:$0xff] %v440
        %457 = vst [vmem:[#allocation2 + $0x68] sm:$0xff] %v441
        %458 = vst [vmem:[#allocation2 + $0x70] sm:$0xff] %v442
        %459 = vst [vmem:[#allocation2 + $0x78] sm:$0xff] %v443
        // Predicated region
        $region41: #{tpu_custom_call.1} parent=27 // pred_check
          %p460 = pneg %p215
        $region42: #{tpu_custom_call.1} parent=27 // pred_check_branch
          %462 = sbr.rel (%p460) target = $region44
        $region43: #{tpu_custom_call.1} parent=27 // pred_region
          %v463 = vld [vmem:[#allocation2] sm:$0xff]
          %v464 = vld [vmem:[#allocation2 + $0x8] sm:$0xff]
          %v465 = vld [vmem:[#allocation2 + $0x10] sm:$0xff]
          %v466 = vld [vmem:[#allocation2 + $0x18] sm:$0xff]
          %v467 = vld [vmem:[#allocation2 + $0x20] sm:$0xff]
          %v468 = vld [vmem:[#allocation2 + $0x28] sm:$0xff]
          %v469 = vld [vmem:[#allocation2 + $0x30] sm:$0xff]
          %v470 = vld [vmem:[#allocation2 + $0x38] sm:$0xff]
          %v471 = vld [vmem:[#allocation2 + $0x40] sm:$0xff]
          %v472 = vld [vmem:[#allocation2 + $0x48] sm:$0xff]
          %v473 = vld [vmem:[#allocation2 + $0x50] sm:$0xff]
          %v474 = vld [vmem:[#allocation2 + $0x58] sm:$0xff]
          %v475 = vld [vmem:[#allocation2 + $0x60] sm:$0xff]
          %v476 = vld [vmem:[#allocation2 + $0x68] sm:$0xff]
          %v477 = vld [vmem:[#allocation2 + $0x70] sm:$0xff]
          %v478 = vld [vmem:[#allocation2 + $0x78] sm:$0xff]
          %479 = vst [vmem:[%s211] sm:$0xff] %v463
          %480 = vst [vmem:[%s211 + $0x8] sm:$0xff] %v464
          %481 = vst [vmem:[%s211 + $0x10] sm:$0xff] %v465
          %482 = vst [vmem:[%s211 + $0x18] sm:$0xff] %v466
          %483 = vst [vmem:[%s211 + $0x20] sm:$0xff] %v467
          %484 = vst [vmem:[%s211 + $0x28] sm:$0xff] %v468
          %485 = vst [vmem:[%s211 + $0x30] sm:$0xff] %v469
          %486 = vst [vmem:[%s211 + $0x38] sm:$0xff] %v470
          %487 = vst [vmem:[%s211 + $0x40] sm:$0xff] %v471
          %488 = vst [vmem:[%s211 + $0x48] sm:$0xff] %v472
          %489 = vst [vmem:[%s211 + $0x50] sm:$0xff] %v473
          %490 = vst [vmem:[%s211 + $0x58] sm:$0xff] %v474
          %491 = vst [vmem:[%s211 + $0x60] sm:$0xff] %v475
          %492 = vst [vmem:[%s211 + $0x68] sm:$0xff] %v476
          %493 = vst [vmem:[%s211 + $0x70] sm:$0xff] %v477
          %494 = vst [vmem:[%s211 + $0x78] sm:$0xff] %v478
        $region44: #{tpu_custom_call.1} parent=27 // pred_fallthru
          _
        %s495 = sand.u32 %s105, 1
        %s496 = scalar_lea.sflag [#allocation5], %s495
        %s497 = sand.u32 %s105, 1
        %s498 = smul.addr %s497, 128
        %s499 = scalar_lea.vmem [#allocation8], %s498
        // Predicated region
        $region45: #{tpu_custom_call.1} parent=27 // pred_check
          %p500 = pneg %p115
        $region46: #{tpu_custom_call.1} parent=27 // pred_check_branch
          %502 = sbr.rel (%p500) target = $region48
        $region47: #{tpu_custom_call.1} parent=27 // pred_region
          %s503 = smul.u32 16, %s25
          %s505 = ssub.s32 2048, 2048
          %506 = vsyncadd %s496, %s505
          %s507 = sadd.s32 %s26, %s503
          %s508 = smul.addr %s507, 128
          %s509 = scalar_lea.hbm %s2, %s508
          %s510 = sshll.u32 %s499, 4
          %s511 = int_to_ptr.vmem [resolvable:$true] %s510
          %516 = dma.vmem_to_hbm [thread:$0]  %s511, 2048, %s509, %s496, 128, 128, 8
        $region48: #{tpu_custom_call.1} parent=27 // pred_fallthru
          _
      $region28: #{tpu_custom_call.1} parent=5 // pred_fallthru
        _
      %p517 = scmp.le.s32.totalorder 2, %s15
      // Predicated region
      $region49: #{tpu_custom_call.1} parent=5 // pred_check
        %p518 = pneg %p517
      $region50: #{tpu_custom_call.1} parent=5 // pred_check_branch
        %520 = sbr.rel (%p518) target = $region52
      $region51: #{tpu_custom_call.1} parent=5 // pred_region
        %s521 = ssub.s32 %s15, 2
        // Predicated region
        $region53: #{tpu_custom_call.1} parent=51 // pred_check
          %p522 = pneg %p121
        $region54: #{tpu_custom_call.1} parent=51 // pred_check_branch
          %524 = sbr.rel (%p522) target = $region56
        $region55: #{tpu_custom_call.1} parent=51 // pred_region
          %s525 = sand.u32 %s106, 1
          %s526 = scalar_lea.sflag [#allocation5], %s525
          %s527 = sand.u32 %s106, 1
          %s528 = smul.addr %s527, 128
          %s529 = scalar_lea.vmem [#allocation8], %s528
          %530 = dma.done %s526, 2048
        $region56: #{tpu_custom_call.1} parent=51 // pred_fallthru
          _
      $region52: #{tpu_custom_call.1} parent=5 // pred_fallthru
        _
    $region6: #{tpu_custom_call.1} parent=1 // loop_footer
      %s19 = sadd.s32 1, %s15
    $region7: #{tpu_custom_call.1} parent=1 // loop_footer_branch
      %14 = sbr.rel target = $region3
    $region8: #{tpu_custom_call.1} parent=1 // loop_exit
      _
    %531 = vsyncpa [#allocation4], 1
    %s532 = scalar_lea.sflag [#allocation4], 1
    %533 = vsyncpa %s532, 1
    %534 = vsyncpa [#allocation7], 1
    %535 = vsyncpa [#allocation5], 1
    %s536 = scalar_lea.sflag [#allocation5], 1
    %537 = vsyncpa %s536, 1

</llo_original>
